<compile_context>
chip_gen: v7x
topology: tpu7x:2x2x1
jax: 0.10.0
libtpu: 0.0.40
codegen_flags: <defaults>
</compile_context>

<pallas_src>
import jax
import jax.numpy as jnp
from jax.experimental import pallas as pl
from jax.experimental.pallas import tpu as pltpu


def _attention_kernel(cases_ref, questions_ref, dec_ref,
                      wcT_ref, wqT_ref, weffT_ref, beff_ref, expand_ref,
                      vcsel_ref, vqsel_ref,
                      att_c_ref, att_q_ref,
                      d_pack_ref):
    bb = cases_ref.shape[0]
    _, de_len, dec = dec_ref.shape
    td = de_len * dec
    f32 = jnp.float32
    cdt = dec_ref.dtype                 # bf16 on MXU operand paths (f32 accumulation)

    # ---- D = uc(uc(decoded)), fused into ONE [dec, dec] matmul (weffT = ucT @ ucT) ----
    # Small weights only: no [td, td] block-diagonal operand (scaled as (de_len*dec)^2).
    d_small = (jnp.dot(dec_ref[...].reshape(bb * de_len, dec), weffT_ref[...],
                       preferred_element_type=f32)
               + beff_ref[...]).reshape(bb, de_len, dec)             # [bb, de_len, dec] f32
    # Tiny relayout into the lane-packed (t, d) layout used by the tanh stage:
    # de_len static sub-tile stores of a [bb, dec] slab (D itself is only [bb, td]).
    for t in range(de_len):
        d_pack_ref[:, t * dec:(t + 1) * dec] = d_small[:, t, :]
    d_packed = d_pack_ref[...]                                       # [bb, td] f32

    def project_and_attend(x_ref, wT_ref, vsel_ref, out_ref):
        _, length, enc = x_ref.shape
        # Encoder projection: ONE bf16 MXU matmul over the whole batch block with the
        # plain [enc, dec] weight (the old de_len-replicated [enc, td] weight multiplied
        # projection FLOPs and weight DMA by de_len).
        small = jnp.dot(x_ref[...].reshape(bb * length, enc), wT_ref[...],
                        preferred_element_type=f32)                  # [bb*len, dec]
        # Lane-pack to (t, d) order with a small [dec, td] block-identity matmul on the
        # MXU (cost dec*td per row instead of enc*td); keeps the tanh stream on full
        # 128-lane vregs instead of a dec-lane (mostly padding) layout.
        packed = jnp.dot(small.astype(cdt), expand_ref[...],
                         preferred_element_type=f32)                 # [bb*len, td]
        act = jnp.tanh(packed.reshape(bb, length, td) + d_packed[:, None, :])
        # Per-decoder-step weighted reduction on the (otherwise idle) MXU via the
        # block-diagonal scoring matrix (no VPU broadcast-multiply + XLU reduce).
        logits = jnp.dot(act.reshape(bb * length, td).astype(cdt), vsel_ref[...],
                         preferred_element_type=f32).reshape(bb, length, de_len)
        # Softmax over the encoder-length axis, in f32 on every generation;
        # divide via the EUP approximate reciprocal (off the critical path).
        m = jnp.max(logits, axis=1, keepdims=True)
        e = jnp.exp(logits - m)
        s = jnp.sum(e, axis=1, keepdims=True)
        out_ref[...] = (e * pl.reciprocal(s, approx=True)).astype(out_ref.dtype)
        # TODO(synk): at production lengths emit [bb, de_len, length] (lane-dense length)
        #             + wrapper transpose instead of this de_len(<128)-lane store layout.

    project_and_attend(cases_ref, wcT_ref, vcsel_ref, att_c_ref)
    # Q projection deliberately deferred until the cases attend completes so the two
    # [bb*len, td] activation streams are never live at the same time.
    project_and_attend(questions_ref, wqT_ref, vqsel_ref, att_q_ref)


def _prepare_params(params, de_len, compute_dtype):
    """Pre-transpose / fuse / restructure weights (runs once, outside the kernel).
    Every operand is now O(enc*dec), O(dec^2), O(dec*td) or O(td*de_len) — nothing scales
    as (de_len*dec)^2 any more."""
    wc, uc, bc, wq, vc, vq = (params["wc"], params["uc"], params["bc"],
                              params["wq"], params["vc"], params["vq"])
    f32 = jnp.float32
    dec = uc.shape[0]
    td = de_len * dec

    ucT = uc.T.astype(f32)
    # Fused double-uc:  (x @ ucT + bc) @ ucT + bc  ==  x @ (ucT @ ucT) + (bc @ ucT + bc).
    # Fusion kept in f32 (cast once afterwards) so bf16 operands don't compound error.
    weffT = ucT @ ucT                                                # [dec, dec]
    beff = bc.astype(f32) @ ucT + bc.astype(f32)                     # [dec]

    # Block-identity lane-pack matrix: expand[d, t*dec + d'] = (d == d').
    expand = jnp.tile(jnp.eye(dec, dtype=f32), (1, de_len))          # [dec, td]
    # Block-diagonal per-step scoring vectors: vsel[t*dec + d, t'] = vc[t, d] * (t == t').
    eye_t = jnp.eye(de_len, dtype=f32)
    vc_sel = (vc.astype(f32)[:, :, None] * eye_t[:, None, :]).reshape(td, de_len)
    vq_sel = (vq.astype(f32)[:, :, None] * eye_t[:, None, :]).reshape(td, de_len)

    cdt = compute_dtype
    return (wc.T.astype(cdt), wq.T.astype(cdt), weffT.astype(cdt),
            beff.reshape(1, dec).astype(f32), expand.astype(cdt),
            vc_sel.astype(cdt), vq_sel.astype(cdt))


def _num_tensorcores_per_device():
    """Best-effort count of TensorCores a 'parallel' grid axis can shard across."""
    try:
        kind = jax.devices()[0].device_kind.lower()
    except Exception:
        return 1
    if "v7" in kind:                                   # v7x: 2 TCs per chip
        return 2
    if ("v4" in kind or "v5p" in kind) and "lite" not in kind:   # megacore
        return 2
    return 1                                           # v5e / v6e: 1 TC


def _pick_batch_block(batch, bytes_per_batch_elem, num_cores,
                      vmem_budget=32 * 1024 * 1024):
    """Fewest, fattest grid steps: each step costs ~0.35us of pipeline overhead and an MXU
    drain, and a larger bb raises the matmul M dim toward the MXU height.  Split only to
    (a) keep the per-step working set under the VMEM budget or (b) hand each TensorCore of
    a 2-TC chip its own block."""
    max_bb = max(1, min(batch, vmem_budget // max(1, bytes_per_batch_elem)))
    want_blocks = num_cores if batch >= num_cores else 1
    bb = max_bb
    while bb > 1 and (batch % bb != 0 or (batch // bb) % want_blocks != 0):
        bb -= 1
    return bb


def attention_layer(cases, questions, decoded, params, *, compute_dtype=jnp.bfloat16):
    """cases: [B, c_len, c_enc], questions: [B, q_len, q_enc], decoded: [B, de_len, dec].
    Returns (att_c [B, c_len, de_len], att_q [B, q_len, de_len]) in float32."""
    B, c_len, c_enc = cases.shape
    _, q_len, q_enc = questions.shape
    _, de_len, dec = decoded.shape
    td = de_len * dec

    (wcT, wqT, weffT, beff, expand, vc_sel, vq_sel) = _prepare_params(
        params, de_len, compute_dtype)

    # Layout/dtype plumbing only (no compute moved out of the kernel).
    cases = cases.astype(compute_dtype)
    questions = questions.astype(compute_dtype)
    decoded = decoded.astype(compute_dtype)

    # Per-batch-element live working set (f32 packed activations dominate).
    per_b_bytes = (4 * 3 * td * max(c_len, q_len)
                   + 2 * (c_len * c_enc + q_len * q_enc)
                   + 4 * de_len * (c_len + q_len))
    bb = _pick_batch_block(B, per_b_bytes, _num_tensorcores_per_device())
    grid = (B // bb,)

    const2d = lambda a: pl.BlockSpec(a.shape, lambda i: (0, 0))
    in_specs = [
        pl.BlockSpec((bb, c_len, c_enc), lambda i: (i, 0, 0)),
        pl.BlockSpec((bb, q_len, q_enc), lambda i: (i, 0, 0)),
        pl.BlockSpec((bb, de_len, dec), lambda i: (i, 0, 0)),
        const2d(wcT), const2d(wqT), const2d(weffT), const2d(beff),
        const2d(expand), const2d(vc_sel), const2d(vq_sel),
    ]
    out_specs = (
        pl.BlockSpec((bb, c_len, de_len), lambda i: (i, 0, 0)),
        pl.BlockSpec((bb, q_len, de_len), lambda i: (i, 0, 0)),
    )
    out_shapes = (
        jax.ShapeDtypeStruct((B, c_len, de_len), jnp.float32),
        jax.ShapeDtypeStruct((B, q_len, de_len), jnp.float32),
    )

    return pl.pallas_call(
        _attention_kernel,
        out_shape=out_shapes,
        grid_spec=pltpu.PrefetchScalarGridSpec(
            num_scalar_prefetch=0,
            grid=grid,
            in_specs=in_specs,
            out_specs=out_specs,
            scratch_shapes=[pltpu.VMEM((bb, td), jnp.float32)],   # lane-packed D
        ),
        compiler_params=pltpu.CompilerParams(
            dimension_semantics=("parallel",),
            # Explicit scoped-VMEM limit (well under every generation's physical VMEM)
            # instead of the 16/32 MiB defaults.
            vmem_limit_bytes=48 * 1024 * 1024),
    )(cases, questions, decoded,
      wcT, wqT, weffT, beff, expand, vc_sel, vq_sel)


def _reference(cases, questions, decoded, params):
    """Pure-JAX (f32) reference mirroring the PyTorch forward."""
    wc, uc, bc, wq, vc, vq = (params["wc"], params["uc"], params["bc"],
                              params["wq"], params["vc"], params["vq"])
    C = jnp.einsum("bie,de->bid", cases, wc)
    Q = jnp.einsum("bie,de->bid", questions, wq)
    D = jnp.einsum("btd,ed->bte", decoded, uc) + bc
    D = jnp.einsum("btd,ed->bte", D, uc) + bc
    lc = jnp.einsum("bitd,td->bit", jnp.tanh(C[:, :, None, :] + D[:, None, :, :]), vc)
    lq = jnp.einsum("bitd,td->bit", jnp.tanh(Q[:, :, None, :] + D[:, None, :, :]), vq)
    return jax.nn.softmax(lc, axis=1), jax.nn.softmax(lq, axis=1)


if __name__ == "__main__":
    key = jax.random.PRNGKey(0)
    B, c_len, q_len, de_len = 2, 16, 12, 8
    c_enc_dim, q_enc_dim, dec_dim = 32, 24, 32   # c/q enc dims already include the x2 bidirectional factor

    ks = jax.random.split(key, 9)
    params = {
        "wc": jax.random.normal(ks[0], (dec_dim, c_enc_dim), jnp.float32) * 0.1,
        "uc": jax.random.normal(ks[1], (dec_dim, dec_dim), jnp.float32) * 0.1,
        "bc": jax.random.normal(ks[2], (dec_dim,), jnp.float32) * 0.1,
        "wq": jax.random.normal(ks[3], (dec_dim, q_enc_dim), jnp.float32) * 0.1,
        # uq / bq exist in the module __init__ but are never used in forward; omitted.
        "vc": jax.random.normal(ks[4], (de_len, dec_dim), jnp.float32) * 0.1,
        "vq": jax.random.normal(ks[5], (de_len, dec_dim), jnp.float32) * 0.1,
    }

    cases = jax.random.normal(ks[6], (B, c_len, c_enc_dim), jnp.float32)
    questions = jax.random.normal(ks[7], (B, q_len, q_enc_dim), jnp.float32)
    decoded = jax.random.normal(ks[8], (B, de_len, dec_dim), jnp.float32)

    att_c, att_q = attention_layer(cases, questions, decoded, params)
    jax.block_until_ready((att_c, att_q))

    ref_c, ref_q = _reference(cases, questions, decoded, params)
    assert att_c.shape == (B, c_len, de_len) and att_q.shape == (B, q_len, de_len)
    # Tolerance covers bf16 MXU operands (f32 accumulation), the fused-weight rounding,
    # and the EUP approximate-reciprocal softmax divide (attention rows sum to 1 only to
    # ~1e-3 relative).  Real layout/axis bugs would be O(0.1) off.
    assert jnp.allclose(att_c, ref_c, atol=5e-3, rtol=5e-3)
    assert jnp.allclose(att_q, ref_q, atol=5e-3, rtol=5e-3)

    print("KERNEL_OK")
</pallas_src>

<mosaic_0001>
module attributes {stable_mosaic.version = 11 : i64} {
  func.func @_attention_kernel(%arg0: i32, %arg1: memref<2x16x32xbf16, #tpu.memory_space<vmem>>, %arg2: memref<2x12x24xbf16, #tpu.memory_space<vmem>>, %arg3: memref<2x8x32xbf16, #tpu.memory_space<vmem>>, %arg4: memref<32x32xbf16, #tpu.memory_space<vmem>>, %arg5: memref<24x32xbf16, #tpu.memory_space<vmem>>, %arg6: memref<32x32xbf16, #tpu.memory_space<vmem>>, %arg7: memref<1x32xf32, #tpu.memory_space<vmem>>, %arg8: memref<32x256xbf16, #tpu.memory_space<vmem>>, %arg9: memref<256x8xbf16, #tpu.memory_space<vmem>>, %arg10: memref<256x8xbf16, #tpu.memory_space<vmem>>, %arg11: memref<2x16x8xf32, #tpu.memory_space<vmem>>, %arg12: memref<2x12x8xf32, #tpu.memory_space<vmem>>, %arg13: memref<2x256xf32, #tpu.memory_space<vmem>>) attributes {dimension_semantics = [#tpu.dimension_semantics<parallel>], iteration_bounds = array<i64: 1>, scalar_prefetch = 0 : i64, scratch_operands = 1 : i64, tpu.core_type = #tpu.core_type<tc>, window_params = [{transform_indices = @transform_0, window_bounds = array<i64: 2, 16, 32>}, {transform_indices = @transform_1, window_bounds = array<i64: 2, 12, 24>}, {transform_indices = @transform_2, window_bounds = array<i64: 2, 8, 32>}, {pipeline_mode = #tpu.pipeline_mode<synchronous>, transform_indices = @transform_3, window_bounds = array<i64: 32, 32>}, {pipeline_mode = #tpu.pipeline_mode<synchronous>, transform_indices = @transform_4, window_bounds = array<i64: 24, 32>}, {pipeline_mode = #tpu.pipeline_mode<synchronous>, transform_indices = @transform_5, window_bounds = array<i64: 32, 32>}, {pipeline_mode = #tpu.pipeline_mode<synchronous>, transform_indices = @transform_6, window_bounds = array<i64: 1, 32>}, {pipeline_mode = #tpu.pipeline_mode<synchronous>, transform_indices = @transform_7, window_bounds = array<i64: 32, 256>}, {pipeline_mode = #tpu.pipeline_mode<synchronous>, transform_indices = @transform_8, window_bounds = array<i64: 256, 8>}, {pipeline_mode = #tpu.pipeline_mode<synchronous>, transform_indices = @transform_9, window_bounds = array<i64: 256, 8>}, {transform_indices = @transform_10, window_bounds = array<i64: 2, 16, 8>}, {transform_indices = @transform_11, window_bounds = array<i64: 2, 12, 8>}]} {
    %c0 = arith.constant 0 : index
    %c0_0 = arith.constant 0 : index
    %c0_1 = arith.constant 0 : index
    %0 = vector.load %arg3[%c0, %c0_0, %c0_1] : memref<2x8x32xbf16, #tpu.memory_space<vmem>>, vector<2x8x32xbf16>
    %1 = vector.shape_cast %0 : vector<2x8x32xbf16> to vector<16x32xbf16>
    %c0_2 = arith.constant 0 : index
    %c0_3 = arith.constant 0 : index
    %2 = vector.load %arg6[%c0_2, %c0_3] : memref<32x32xbf16, #tpu.memory_space<vmem>>, vector<32x32xbf16>
    %cst = arith.constant dense<0.000000e+00> : vector<16x32xf32>
    %3 = tpu.matmul %1, %2, %cst {dimension_numbers = #tpu.dot_dimension_numbers<[1], [0], [0], [1], [0, 0, 1, 1], [], []>} : vector<16x32xbf16>, vector<32x32xbf16>, vector<16x32xf32> -> vector<16x32xf32>
    %c0_4 = arith.constant 0 : index
    %c0_5 = arith.constant 0 : index
    %4 = vector.load %arg7[%c0_4, %c0_5] : memref<1x32xf32, #tpu.memory_space<vmem>>, vector<1x32xf32>
    %5 = vector.broadcast %4 : vector<1x32xf32> to vector<16x32xf32>
    %6 = arith.addf %3, %5 : vector<16x32xf32>
    %7 = vector.shape_cast %6 : vector<16x32xf32> to vector<2x8x32xf32>
    %8 = vector.extract_strided_slice %7 {offsets = [0, 0, 0], sizes = [2, 1, 32], strides = [1, 1, 1]} : vector<2x8x32xf32> to vector<2x1x32xf32>
    %9 = vector.shape_cast %8 : vector<2x1x32xf32> to vector<2x32xf32>
    %c0_6 = arith.constant 0 : index
    %c0_7 = arith.constant 0 : index
    %10 = vector.load %arg13[%c0_6, %c0_7] : memref<2x256xf32, #tpu.memory_space<vmem>>, vector<2x32xf32>
    tpu.vector_store %arg13[%c0_6, %c0_7], %9 {strides = array<i32>} : memref<2x256xf32, #tpu.memory_space<vmem>>, vector<2x32xf32>,
    %11 = vector.extract_strided_slice %7 {offsets = [0, 1, 0], sizes = [2, 1, 32], strides = [1, 1, 1]} : vector<2x8x32xf32> to vector<2x1x32xf32>
    %12 = vector.shape_cast %11 : vector<2x1x32xf32> to vector<2x32xf32>
    %c0_8 = arith.constant 0 : index
    %c32 = arith.constant 32 : index
    %13 = vector.load %arg13[%c0_8, %c32] : memref<2x256xf32, #tpu.memory_space<vmem>>, vector<2x32xf32>
    tpu.vector_store %arg13[%c0_8, %c32], %12 {strides = array<i32>} : memref<2x256xf32, #tpu.memory_space<vmem>>, vector<2x32xf32>,
    %14 = vector.extract_strided_slice %7 {offsets = [0, 2, 0], sizes = [2, 1, 32], strides = [1, 1, 1]} : vector<2x8x32xf32> to vector<2x1x32xf32>
    %15 = vector.shape_cast %14 : vector<2x1x32xf32> to vector<2x32xf32>
    %c0_9 = arith.constant 0 : index
    %c64 = arith.constant 64 : index
    %16 = vector.load %arg13[%c0_9, %c64] : memref<2x256xf32, #tpu.memory_space<vmem>>, vector<2x32xf32>
    tpu.vector_store %arg13[%c0_9, %c64], %15 {strides = array<i32>} : memref<2x256xf32, #tpu.memory_space<vmem>>, vector<2x32xf32>,
    %17 = vector.extract_strided_slice %7 {offsets = [0, 3, 0], sizes = [2, 1, 32], strides = [1, 1, 1]} : vector<2x8x32xf32> to vector<2x1x32xf32>
    %18 = vector.shape_cast %17 : vector<2x1x32xf32> to vector<2x32xf32>
    %c0_10 = arith.constant 0 : index
    %c96 = arith.constant 96 : index
    %19 = vector.load %arg13[%c0_10, %c96] : memref<2x256xf32, #tpu.memory_space<vmem>>, vector<2x32xf32>
    tpu.vector_store %arg13[%c0_10, %c96], %18 {strides = array<i32>} : memref<2x256xf32, #tpu.memory_space<vmem>>, vector<2x32xf32>,
    %20 = vector.extract_strided_slice %7 {offsets = [0, 4, 0], sizes = [2, 1, 32], strides = [1, 1, 1]} : vector<2x8x32xf32> to vector<2x1x32xf32>
    %21 = vector.shape_cast %20 : vector<2x1x32xf32> to vector<2x32xf32>
    %c0_11 = arith.constant 0 : index
    %c128 = arith.constant 128 : index
    %22 = vector.load %arg13[%c0_11, %c128] : memref<2x256xf32, #tpu.memory_space<vmem>>, vector<2x32xf32>
    tpu.vector_store %arg13[%c0_11, %c128], %21 {strides = array<i32>} : memref<2x256xf32, #tpu.memory_space<vmem>>, vector<2x32xf32>,
    %23 = vector.extract_strided_slice %7 {offsets = [0, 5, 0], sizes = [2, 1, 32], strides = [1, 1, 1]} : vector<2x8x32xf32> to vector<2x1x32xf32>
    %24 = vector.shape_cast %23 : vector<2x1x32xf32> to vector<2x32xf32>
    %c0_12 = arith.constant 0 : index
    %c160 = arith.constant 160 : index
    %25 = vector.load %arg13[%c0_12, %c160] : memref<2x256xf32, #tpu.memory_space<vmem>>, vector<2x32xf32>
    tpu.vector_store %arg13[%c0_12, %c160], %24 {strides = array<i32>} : memref<2x256xf32, #tpu.memory_space<vmem>>, vector<2x32xf32>,
    %26 = vector.extract_strided_slice %7 {offsets = [0, 6, 0], sizes = [2, 1, 32], strides = [1, 1, 1]} : vector<2x8x32xf32> to vector<2x1x32xf32>
    %27 = vector.shape_cast %26 : vector<2x1x32xf32> to vector<2x32xf32>
    %c0_13 = arith.constant 0 : index
    %c192 = arith.constant 192 : index
    %28 = vector.load %arg13[%c0_13, %c192] : memref<2x256xf32, #tpu.memory_space<vmem>>, vector<2x32xf32>
    tpu.vector_store %arg13[%c0_13, %c192], %27 {strides = array<i32>} : memref<2x256xf32, #tpu.memory_space<vmem>>, vector<2x32xf32>,
    %29 = vector.extract_strided_slice %7 {offsets = [0, 7, 0], sizes = [2, 1, 32], strides = [1, 1, 1]} : vector<2x8x32xf32> to vector<2x1x32xf32>
    %30 = vector.shape_cast %29 : vector<2x1x32xf32> to vector<2x32xf32>
    %c0_14 = arith.constant 0 : index
    %c224 = arith.constant 224 : index
    %31 = vector.load %arg13[%c0_14, %c224] : memref<2x256xf32, #tpu.memory_space<vmem>>, vector<2x32xf32>
    tpu.vector_store %arg13[%c0_14, %c224], %30 {strides = array<i32>} : memref<2x256xf32, #tpu.memory_space<vmem>>, vector<2x32xf32>,
    %c0_15 = arith.constant 0 : index
    %c0_16 = arith.constant 0 : index
    %32 = vector.load %arg13[%c0_15, %c0_16] : memref<2x256xf32, #tpu.memory_space<vmem>>, vector<2x256xf32>
    %c0_17 = arith.constant 0 : index
    %c0_18 = arith.constant 0 : index
    %c0_19 = arith.constant 0 : index
    %33 = vector.load %arg1[%c0_17, %c0_18, %c0_19] : memref<2x16x32xbf16, #tpu.memory_space<vmem>>, vector<2x16x32xbf16>
    %34 = vector.shape_cast %33 : vector<2x16x32xbf16> to vector<32x32xbf16>
    %c0_20 = arith.constant 0 : index
    %c0_21 = arith.constant 0 : index
    %35 = vector.load %arg4[%c0_20, %c0_21] : memref<32x32xbf16, #tpu.memory_space<vmem>>, vector<32x32xbf16>
    %cst_22 = arith.constant dense<0.000000e+00> : vector<32x32xf32>
    %36 = tpu.matmul %34, %35, %cst_22 {dimension_numbers = #tpu.dot_dimension_numbers<[1], [0], [0], [1], [0, 0, 1, 1], [], []>} : vector<32x32xbf16>, vector<32x32xbf16>, vector<32x32xf32> -> vector<32x32xf32>
    %37 = arith.truncf %36 : vector<32x32xf32> to vector<32x32xbf16>
    %c0_23 = arith.constant 0 : index
    %c0_24 = arith.constant 0 : index
    %38 = vector.load %arg8[%c0_23, %c0_24] : memref<32x256xbf16, #tpu.memory_space<vmem>>, vector<32x256xbf16>
    %cst_25 = arith.constant dense<0.000000e+00> : vector<32x256xf32>
    %39 = tpu.matmul %37, %38, %cst_25 {dimension_numbers = #tpu.dot_dimension_numbers<[1], [0], [0], [1], [0, 0, 1, 1], [], []>} : vector<32x32xbf16>, vector<32x256xbf16>, vector<32x256xf32> -> vector<32x256xf32>
    %40 = vector.shape_cast %39 : vector<32x256xf32> to vector<2x16x256xf32>
    %41 = vector.shape_cast %32 : vector<2x256xf32> to vector<2x1x256xf32>
    %42 = vector.broadcast %41 : vector<2x1x256xf32> to vector<2x16x256xf32>
    %43 = arith.addf %40, %42 : vector<2x16x256xf32>
    %44 = math.tanh %43 : vector<2x16x256xf32>
    %45 = vector.shape_cast %44 : vector<2x16x256xf32> to vector<32x256xf32>
    %46 = arith.truncf %45 : vector<32x256xf32> to vector<32x256xbf16>
    %c0_26 = arith.constant 0 : index
    %c0_27 = arith.constant 0 : index
    %47 = vector.load %arg9[%c0_26, %c0_27] : memref<256x8xbf16, #tpu.memory_space<vmem>>, vector<256x8xbf16>
    %cst_28 = arith.constant dense<0.000000e+00> : vector<32x8xf32>
    %48 = tpu.matmul %46, %47, %cst_28 {dimension_numbers = #tpu.dot_dimension_numbers<[1], [0], [0], [1], [0, 0, 1, 1], [], []>} : vector<32x256xbf16>, vector<256x8xbf16>, vector<32x8xf32> -> vector<32x8xf32>
    %49 = vector.shape_cast %48 : vector<32x8xf32> to vector<2x16x8xf32>
    %cst_29 = arith.constant dense<0xFF800000> : vector<2x8xf32>
    %50 = vector.multi_reduction <maximumf>, %49, %cst_29 [1] : vector<2x16x8xf32> to vector<2x8xf32>
    %51 = vector.shape_cast %50 : vector<2x8xf32> to vector<2x1x8xf32>
    %52 = vector.broadcast %51 : vector<2x1x8xf32> to vector<2x16x8xf32>
    %53 = arith.subf %49, %52 : vector<2x16x8xf32>
    %54 = math.exp %53 : vector<2x16x8xf32>
    %cst_30 = arith.constant dense<0.000000e+00> : vector<2x8xf32>
    %55 = vector.multi_reduction <add>, %54, %cst_30 [1] : vector<2x16x8xf32> to vector<2x8xf32>
    %56 = vector.shape_cast %55 : vector<2x8xf32> to vector<2x1x8xf32>
    %57 = tpu.reciprocal %56 {approx = true} : vector<2x1x8xf32> -> vector<2x1x8xf32>
    %58 = vector.broadcast %57 : vector<2x1x8xf32> to vector<2x16x8xf32>
    %59 = arith.mulf %54, %58 : vector<2x16x8xf32>
    %c0_31 = arith.constant 0 : index
    %c0_32 = arith.constant 0 : index
    %c0_33 = arith.constant 0 : index
    %60 = vector.load %arg11[%c0_31, %c0_32, %c0_33] : memref<2x16x8xf32, #tpu.memory_space<vmem>>, vector<2x16x8xf32>
    tpu.vector_store %arg11[%c0_31, %c0_32, %c0_33], %59 {strides = array<i32>} : memref<2x16x8xf32, #tpu.memory_space<vmem>>, vector<2x16x8xf32>,
    %c0_34 = arith.constant 0 : index
    %c0_35 = arith.constant 0 : index
    %c0_36 = arith.constant 0 : index
    %61 = vector.load %arg2[%c0_34, %c0_35, %c0_36] : memref<2x12x24xbf16, #tpu.memory_space<vmem>>, vector<2x12x24xbf16>
    %62 = vector.shape_cast %61 : vector<2x12x24xbf16> to vector<24x24xbf16>
    %c0_37 = arith.constant 0 : index
    %c0_38 = arith.constant 0 : index
    %63 = vector.load %arg5[%c0_37, %c0_38] : memref<24x32xbf16, #tpu.memory_space<vmem>>, vector<24x32xbf16>
    %cst_39 = arith.constant dense<0.000000e+00> : vector<24x32xf32>
    %64 = tpu.matmul %62, %63, %cst_39 {dimension_numbers = #tpu.dot_dimension_numbers<[1], [0], [0], [1], [0, 0, 1, 1], [], []>} : vector<24x24xbf16>, vector<24x32xbf16>, vector<24x32xf32> -> vector<24x32xf32>
    %65 = arith.truncf %64 : vector<24x32xf32> to vector<24x32xbf16>
    %c0_40 = arith.constant 0 : index
    %c0_41 = arith.constant 0 : index
    %66 = vector.load %arg8[%c0_40, %c0_41] : memref<32x256xbf16, #tpu.memory_space<vmem>>, vector<32x256xbf16>
    %cst_42 = arith.constant dense<0.000000e+00> : vector<24x256xf32>
    %67 = tpu.matmul %65, %66, %cst_42 {dimension_numbers = #tpu.dot_dimension_numbers<[1], [0], [0], [1], [0, 0, 1, 1], [], []>} : vector<24x32xbf16>, vector<32x256xbf16>, vector<24x256xf32> -> vector<24x256xf32>
    %68 = vector.shape_cast %67 : vector<24x256xf32> to vector<2x12x256xf32>
    %69 = vector.shape_cast %32 : vector<2x256xf32> to vector<2x1x256xf32>
    %70 = vector.broadcast %69 : vector<2x1x256xf32> to vector<2x12x256xf32>
    %71 = arith.addf %68, %70 : vector<2x12x256xf32>
    %72 = math.tanh %71 : vector<2x12x256xf32>
    %73 = vector.shape_cast %72 : vector<2x12x256xf32> to vector<24x256xf32>
    %74 = arith.truncf %73 : vector<24x256xf32> to vector<24x256xbf16>
    %c0_43 = arith.constant 0 : index
    %c0_44 = arith.constant 0 : index
    %75 = vector.load %arg10[%c0_43, %c0_44] : memref<256x8xbf16, #tpu.memory_space<vmem>>, vector<256x8xbf16>
    %cst_45 = arith.constant dense<0.000000e+00> : vector<24x8xf32>
    %76 = tpu.matmul %74, %75, %cst_45 {dimension_numbers = #tpu.dot_dimension_numbers<[1], [0], [0], [1], [0, 0, 1, 1], [], []>} : vector<24x256xbf16>, vector<256x8xbf16>, vector<24x8xf32> -> vector<24x8xf32>
    %77 = vector.shape_cast %76 : vector<24x8xf32> to vector<2x12x8xf32>
    %cst_46 = arith.constant dense<0xFF800000> : vector<2x8xf32>
    %78 = vector.multi_reduction <maximumf>, %77, %cst_46 [1] : vector<2x12x8xf32> to vector<2x8xf32>
    %79 = vector.shape_cast %78 : vector<2x8xf32> to vector<2x1x8xf32>
    %80 = vector.broadcast %79 : vector<2x1x8xf32> to vector<2x12x8xf32>
    %81 = arith.subf %77, %80 : vector<2x12x8xf32>
    %82 = math.exp %81 : vector<2x12x8xf32>
    %cst_47 = arith.constant dense<0.000000e+00> : vector<2x8xf32>
    %83 = vector.multi_reduction <add>, %82, %cst_47 [1] : vector<2x12x8xf32> to vector<2x8xf32>
    %84 = vector.shape_cast %83 : vector<2x8xf32> to vector<2x1x8xf32>
    %85 = tpu.reciprocal %84 {approx = true} : vector<2x1x8xf32> -> vector<2x1x8xf32>
    %86 = vector.broadcast %85 : vector<2x1x8xf32> to vector<2x12x8xf32>
    %87 = arith.mulf %82, %86 : vector<2x12x8xf32>
    %c0_48 = arith.constant 0 : index
    %c0_49 = arith.constant 0 : index
    %c0_50 = arith.constant 0 : index
    %88 = vector.load %arg12[%c0_48, %c0_49, %c0_50] : memref<2x12x8xf32, #tpu.memory_space<vmem>>, vector<2x12x8xf32>
    tpu.vector_store %arg12[%c0_48, %c0_49, %c0_50], %87 {strides = array<i32>} : memref<2x12x8xf32, #tpu.memory_space<vmem>>, vector<2x12x8xf32>,
    return
  }
  func.func @transform_0(%arg0: i32) -> (i32, i32, i32) {
    %c0_i32 = arith.constant 0 : i32
    %c0_i32_0 = arith.constant 0 : i32
    %c0_i32_1 = arith.constant 0 : i32
    return %arg0, %c0_i32, %c0_i32_0 : i32, i32, i32
  }
  func.func @transform_1(%arg0: i32) -> (i32, i32, i32) {
    %c0_i32 = arith.constant 0 : i32
    %c0_i32_0 = arith.constant 0 : i32
    %c0_i32_1 = arith.constant 0 : i32
    return %arg0, %c0_i32, %c0_i32_0 : i32, i32, i32
  }
  func.func @transform_2(%arg0: i32) -> (i32, i32, i32) {
    %c0_i32 = arith.constant 0 : i32
    %c0_i32_0 = arith.constant 0 : i32
    %c0_i32_1 = arith.constant 0 : i32
    return %arg0, %c0_i32, %c0_i32_0 : i32, i32, i32
  }
  func.func @transform_3(%arg0: i32) -> (i32, i32) {
    %c0_i32 = arith.constant 0 : i32
    %c0_i32_0 = arith.constant 0 : i32
    %c0_i32_1 = arith.constant 0 : i32
    return %c0_i32, %c0_i32_0 : i32, i32
  }
  func.func @transform_4(%arg0: i32) -> (i32, i32) {
    %c0_i32 = arith.constant 0 : i32
    %c0_i32_0 = arith.constant 0 : i32
    %c0_i32_1 = arith.constant 0 : i32
    return %c0_i32, %c0_i32_0 : i32, i32
  }
  func.func @transform_5(%arg0: i32) -> (i32, i32) {
    %c0_i32 = arith.constant 0 : i32
    %c0_i32_0 = arith.constant 0 : i32
    %c0_i32_1 = arith.constant 0 : i32
    return %c0_i32, %c0_i32_0 : i32, i32
  }
  func.func @transform_6(%arg0: i32) -> (i32, i32) {
    %c0_i32 = arith.constant 0 : i32
    %c0_i32_0 = arith.constant 0 : i32
    %c0_i32_1 = arith.constant 0 : i32
    return %c0_i32, %c0_i32_0 : i32, i32
  }
  func.func @transform_7(%arg0: i32) -> (i32, i32) {
    %c0_i32 = arith.constant 0 : i32
    %c0_i32_0 = arith.constant 0 : i32
    %c0_i32_1 = arith.constant 0 : i32
    return %c0_i32, %c0_i32_0 : i32, i32
  }
  func.func @transform_8(%arg0: i32) -> (i32, i32) {
    %c0_i32 = arith.constant 0 : i32
    %c0_i32_0 = arith.constant 0 : i32
    %c0_i32_1 = arith.constant 0 : i32
    return %c0_i32, %c0_i32_0 : i32, i32
  }
  func.func @transform_9(%arg0: i32) -> (i32, i32) {
    %c0_i32 = arith.constant 0 : i32
    %c0_i32_0 = arith.constant 0 : i32
    %c0_i32_1 = arith.constant 0 : i32
    return %c0_i32, %c0_i32_0 : i32, i32
  }
  func.func @transform_10(%arg0: i32) -> (i32, i32, i32) {
    %c0_i32 = arith.constant 0 : i32
    %c0_i32_0 = arith.constant 0 : i32
    %c0_i32_1 = arith.constant 0 : i32
    return %arg0, %c0_i32, %c0_i32_0 : i32, i32, i32
  }
  func.func @transform_11(%arg0: i32) -> (i32, i32, i32) {
    %c0_i32 = arith.constant 0 : i32
    %c0_i32_0 = arith.constant 0 : i32
    %c0_i32_1 = arith.constant 0 : i32
    return %arg0, %c0_i32, %c0_i32_0 : i32, i32, i32
  }
}

</mosaic_0001>

<llo_original>
// kernel: tpu_custom_call.1
$region0: #{tpu_custom_call.1}
  #allocation0 [shape = 'u32[]', space=smem, size = 0x4, offset = 0x4, fixed_abs, tag = 'smem constant byte address 0x4 - core index']
  #allocation1 [shape = 'u32[144,128]{1,0:T(1,128)}', space=vmem, size = 0x12000, scoped, tag = 'internal scratch']
  #allocation2 [shape = 'f32[2,256]{1,0:T(2,128)}', space=vmem, size = 0x800, scoped, tag = 'scratch operand']
  %s0 = inlined_call_operand.vmem [shape: bf16[2,16,32], index: 0, kind: input, shape index: {}]
  %s1 = inlined_call_operand.vmem [shape: bf16[2,12,24], index: 1, kind: input, shape index: {}]
  %s2 = inlined_call_operand.vmem [shape: bf16[2,8,32], index: 2, kind: input, shape index: {}]
  %s3 = inlined_call_operand.vmem [shape: bf16[32,32], index: 3, kind: input, shape index: {}]
  %s4 = inlined_call_operand.vmem [shape: bf16[24,32], index: 4, kind: input, shape index: {}]
  %s5 = inlined_call_operand.vmem [shape: bf16[32,32], index: 5, kind: input, shape index: {}]
  %s6 = inlined_call_operand.vmem [shape: f32[1,32], index: 6, kind: input, shape index: {}]
  %s7 = inlined_call_operand.vmem [shape: bf16[32,256], index: 7, kind: input, shape index: {}]
  %s8 = inlined_call_operand.vmem [shape: bf16[256,8], index: 8, kind: input, shape index: {}]
  %s9 = inlined_call_operand.vmem [shape: bf16[256,8], index: 9, kind: input, shape index: {}]
  %s10 = inlined_call_operand.vmem [shape: f32[2,16,8], index: 10, kind: output, shape index: {0}]
  %s11 = inlined_call_operand.vmem [shape: f32[2,12,8], index: 11, kind: output, shape index: {1}]
  %12 = xla_tuple %s10, %s11
  %s13 = sld [smem:[#allocation0]]
  $region58: #{tpu_custom_call.1} parent=0
    _
  %s15 = ssub.s32 1, %s13
  %s16 = scalar_select 0, %s15, %s13
  // Predicated region
  $region2: #{tpu_custom_call.1} parent=0 // pred_check
    _
  $region3: #{tpu_custom_call.1} parent=0 // pred_check_branch
    %18 = sbr.rel (0) target = $region5
  $region4: #{tpu_custom_call.1} parent=0 // pred_region
    _
  $region5: #{tpu_custom_call.1} parent=0 // pred_fallthru
    _
  // Predicated region
  $region6: #{tpu_custom_call.1} parent=0 // pred_check
    _
  $region7: #{tpu_custom_call.1} parent=0 // pred_check_branch
    %20 = sbr.rel (0) target = $region9
  $region8: #{tpu_custom_call.1} parent=0 // pred_region
    _
  $region9: #{tpu_custom_call.1} parent=0 // pred_fallthru
    _
  // Predicated region
  $region10: #{tpu_custom_call.1} parent=0 // pred_check
    _
  $region11: #{tpu_custom_call.1} parent=0 // pred_check_branch
    %22 = sbr.rel (0) target = $region13
  $region12: #{tpu_custom_call.1} parent=0 // pred_region
    _
  $region13: #{tpu_custom_call.1} parent=0 // pred_fallthru
    _
  // Predicated region
  $region14: #{tpu_custom_call.1} parent=0 // pred_check
    _
  $region15: #{tpu_custom_call.1} parent=0 // pred_check_branch
    %24 = sbr.rel (0) target = $region17
  $region16: #{tpu_custom_call.1} parent=0 // pred_region
    _
  $region17: #{tpu_custom_call.1} parent=0 // pred_fallthru
    _
  // Predicated region
  $region18: #{tpu_custom_call.1} parent=0 // pred_check
    _
  $region19: #{tpu_custom_call.1} parent=0 // pred_check_branch
    %26 = sbr.rel (0) target = $region21
  $region20: #{tpu_custom_call.1} parent=0 // pred_region
    _
  $region21: #{tpu_custom_call.1} parent=0 // pred_fallthru
    _
  // Predicated region
  $region22: #{tpu_custom_call.1} parent=0 // pred_check
    _
  $region23: #{tpu_custom_call.1} parent=0 // pred_check_branch
    %28 = sbr.rel (0) target = $region25
  $region24: #{tpu_custom_call.1} parent=0 // pred_region
    _
  $region25: #{tpu_custom_call.1} parent=0 // pred_fallthru
    _
  // Predicated region
  $region26: #{tpu_custom_call.1} parent=0 // pred_check
    _
  $region27: #{tpu_custom_call.1} parent=0 // pred_check_branch
    %30 = sbr.rel (0) target = $region29
  $region28: #{tpu_custom_call.1} parent=0 // pred_region
    _
  $region29: #{tpu_custom_call.1} parent=0 // pred_fallthru
    _
  // Predicated region
  $region30: #{tpu_custom_call.1} parent=0 // pred_check
    _
  $region31: #{tpu_custom_call.1} parent=0 // pred_check_branch
    %32 = sbr.rel (0) target = $region33
  $region32: #{tpu_custom_call.1} parent=0 // pred_region
    _
  $region33: #{tpu_custom_call.1} parent=0 // pred_fallthru
    _
  // Predicated region
  $region34: #{tpu_custom_call.1} parent=0 // pred_check
    _
  $region35: #{tpu_custom_call.1} parent=0 // pred_check_branch
    %34 = sbr.rel (0) target = $region37
  $region36: #{tpu_custom_call.1} parent=0 // pred_region
    _
  $region37: #{tpu_custom_call.1} parent=0 // pred_fallthru
    _
  // Predicated region
  $region38: #{tpu_custom_call.1} parent=0 // pred_check
    _
  $region39: #{tpu_custom_call.1} parent=0 // pred_check_branch
    %36 = sbr.rel (0) target = $region41
  $region40: #{tpu_custom_call.1} parent=0 // pred_region
    _
  $region41: #{tpu_custom_call.1} parent=0 // pred_fallthru
    _
  %v38 = vld [vmem:[%s2] sm:$0xf]
  %v39 = vld [vmem:[%s2 + $0x4] sm:$0xf]
  %v40 = vld [vmem:[%s5] sm:$0xf]
  %v41 = vld [vmem:[%s5 + $0x4] sm:$0xf]
  %v42 = vld [vmem:[%s5 + $0x8] sm:$0xf]
  %v43 = vld [vmem:[%s5 + $0xc] sm:$0xf]
  %v44 = vld [vmem:[%s6] sm:$0x1]
  %v46 = vlaneseq
  %v47 = vshrl.u32 %v46, 7
  %v48 = vsub.s32 0, %v47
  %v49 = vrot.slane %v44, %v48
  %v53 = vunpack.c.l.b16 %v38
  %v54 = vunpack.c.l.b16 %v39
  %v55 = vpack.c.b16 %v54, %v53
  %v60 = vunpack.c.l.b16 %v40
  %v61 = vunpack.c.l.b16 %v41
  %v62 = vunpack.c.l.b16 %v42
  %v63 = vunpack.c.l.b16 %v43
  %v64 = vpack.c.b16 %v61, %v60
  %v65 = vpack.c.b16 %v63, %v62
  %vm68 = vcmask 261120
  %v70 = vsel %vm68, %v55, 0
  %72 = vmatprep.subr.bf16.mxu0 0
  %73 = vmatpush1.bf16.msra.mxu0 %v64
  %74 = vmatprep.subr.bf16.mxu0 0
  %75 = vmatpush1.bf16.msra.mxu0 %v65
  %76 = vmatprep.subr.bf16.mxu0 0
  %77 = vmatpush1.bf16.msra.mxu0 0
  %78 = vmatprep.subr.bf16.mxu0 0
  %79 = vmatpush1.bf16.msra.mxu0 0
  %80 = vmatprep.subr.bf16.mxu0 0
  %81 = vmatpush1.bf16.msra.mxu0 0
  %82 = vmatprep.subr.bf16.mxu0 0
  %83 = vmatpush1.bf16.msra.mxu0 0
  %84 = vmatprep.subr.bf16.mxu0 0
  %85 = vmatpush1.bf16.msra.mxu0 0
  %86 = vmatprep.subr.bf16.mxu0 0
  %87 = vmatpush1.bf16.msra.mxu0 0
  %88 = vmatprep.subr.bf16.mxu0 0
  %89 = vmatpush1.bf16.msra.mxu0 0
  %90 = vmatprep.subr.bf16.mxu0 0
  %91 = vmatpush1.bf16.msra.mxu0 0
  %92 = vmatprep.subr.bf16.mxu0 0
  %93 = vmatpush1.bf16.msra.mxu0 0
  %94 = vmatprep.subr.bf16.mxu0 0
  %95 = vmatpush1.bf16.msra.mxu0 0
  %96 = vmatprep.subr.bf16.mxu0 0
  %97 = vmatpush1.bf16.msra.mxu0 0
  %98 = vmatprep.subr.bf16.mxu0 0
  %99 = vmatpush1.bf16.msra.mxu0 0
  %100 = vmatprep.subr.bf16.mxu0 0
  %101 = vmatpush1.bf16.msra.mxu0 0
  %102 = vmatprep.subr.bf16.mxu0 0
  %103 = vmatpush1.bf16.msra.mxu0 0
  %104 = vmatprep.mubr.bf16.mxu0 0
  %105 = vmatmul.mubr.bf16.gmra.mrb[0].mxu0 %v70
  %v106 = vpop.f32.mrb[0].mxu0
  %v107 = vadd.f32 %v49, %v106
  %v108 = vpop.f32.mrb[0].mxu0
  %v109 = vpop.f32.mrb[0].mxu0
  %v110 = vadd.f32 %v49, %v109
  %v111 = vpop.f32.mrb[0].mxu0
  %112 = vdwg.mxu0
  %v116 = vunpack.c.l.s4 1983009808
  %v117 = vunpack.c.0.s8 %v116
  %v118 = vlaneseq
  %v119 = vshrl.u32 %v118, 7
  %v120 = vsub.s32 %v117, %v119
  %v121 = vrot.slane %v107, %v120
  %v123 = vunpack.c.l.s4 1983009808
  %v124 = vunpack.c.0.s8 %v123
  %v125 = vlaneseq
  %v126 = vshrl.u32 %v125, 7
  %v127 = vsub.s32 %v124, %v126
  %v128 = vrot.slane %v110, %v127
  %vm129 = vcmask 1044484
  %v130 = vsel %vm129, %v121, %v121
  %vm131 = vcmask 1046534
  %v132 = vsel %vm131, %v121, %v130
  %v133 = vrot.slane %v128, 7
  %vm134 = vcmask 1041409
  %v135 = vsel %vm134, %v133, %v132
  %vm136 = vcmask 1043459
  %v137 = vsel %vm136, %v133, %v135
  %vm138 = vcmask 1045509
  %v139 = vsel %vm138, %v133, %v137
  %vm140 = vcmask 1047559
  %v141 = vsel %vm140, %v133, %v139
  %vm143 = vcmask 254976
  %144 = vst.msk [vmem:[#allocation2] sm:$0x3] %vm143, %v141
  %v145 = vrot.slane %v121, 1
  %v146 = vsel %vm129, %v145, %v145
  %v147 = vsel %vm131, %v145, %v146
  %v148 = vsel %vm134, %v128, %v147
  %v149 = vsel %vm136, %v128, %v148
  %v150 = vsel %vm138, %v128, %v149
  %v151 = vsel %vm140, %v128, %v150
  %152 = vrot.lane.b32.xlu0 %v151, 32
  %v153 = vpop.permute.xlu0 %152
  %vm155 = vcmask 517376
  %156 = vst.msk [vmem:[#allocation2] sm:$0x3] %vm155, %v153
  %v157 = vcombine.high %v121, %v121
  %v158 = vcombine.high %v128, %v128
  %v159 = vsel %vm129, %v157, %v157
  %v160 = vsel %vm131, %v157, %v159
  %v161 = vrot.slane %v158, 7
  %v162 = vsel %vm134, %v161, %v160
  %v163 = vsel %vm136, %v161, %v162
  %v164 = vsel %vm138, %v161, %v163
  %v165 = vsel %vm140, %v161, %v164
  %166 = vrot.lane.b32.xlu0 %v165, 64
  %v167 = vpop.permute.xlu0 %166
  %vm169 = vcmask 779776
  %170 = vst.msk [vmem:[#allocation2] sm:$0x3] %vm169, %v167
  %v171 = vrot.slane %v157, 1
  %v172 = vsel %vm129, %v171, %v171
  %v173 = vsel %vm131, %v171, %v172
  %v174 = vsel %vm134, %v158, %v173
  %v175 = vsel %vm136, %v158, %v174
  %v176 = vsel %vm138, %v158, %v175
  %v177 = vsel %vm140, %v158, %v176
  %178 = vrot.lane.b32.xlu0 %v177, 96
  %v179 = vpop.permute.xlu0 %178
  %vm181 = vcmask 1042176
  %182 = vst.msk [vmem:[#allocation2] sm:$0x3] %vm181, %v179
  %v183 = vcombine.high %v107, %v107
  %v185 = vunpack.c.l.s4 1983009808
  %v186 = vunpack.c.0.s8 %v185
  %v187 = vlaneseq
  %v188 = vshrl.u32 %v187, 7
  %v189 = vsub.s32 %v186, %v188
  %v190 = vrot.slane %v183, %v189
  %v191 = vcombine.high %v110, %v110
  %v193 = vunpack.c.l.s4 1983009808
  %v194 = vunpack.c.0.s8 %v193
  %v195 = vlaneseq
  %v196 = vshrl.u32 %v195, 7
  %v197 = vsub.s32 %v194, %v196
  %v198 = vrot.slane %v191, %v197
  %v199 = vsel %vm129, %v190, %v190
  %v200 = vsel %vm131, %v190, %v199
  %v201 = vrot.slane %v198, 7
  %v202 = vsel %vm134, %v201, %v200
  %v203 = vsel %vm136, %v201, %v202
  %v204 = vsel %vm138, %v201, %v203
  %v205 = vsel %vm140, %v201, %v204
  %207 = vst.msk [vmem:[#allocation2 + $0x2] sm:$0x3] %vm143, %v205
  %v208 = vrot.slane %v190, 1
  %v209 = vsel %vm129, %v208, %v208
  %v210 = vsel %vm131, %v208, %v209
  %v211 = vsel %vm134, %v198, %v210
  %v212 = vsel %vm136, %v198, %v211
  %v213 = vsel %vm138, %v198, %v212
  %v214 = vsel %vm140, %v198, %v213
  %215 = vrot.lane.b32.xlu0 %v214, 32
  %v216 = vpop.permute.xlu0 %215
  %218 = vst.msk [vmem:[#allocation2 + $0x2] sm:$0x3] %vm155, %v216
  %v219 = vcombine.high %v190, %v190
  %v220 = vcombine.high %v198, %v198
  %v221 = vsel %vm129, %v219, %v219
  %v222 = vsel %vm131, %v219, %v221
  %v223 = vrot.slane %v220, 7
  %v224 = vsel %vm134, %v223, %v222
  %v225 = vsel %vm136, %v223, %v224
  %v226 = vsel %vm138, %v223, %v225
  %v227 = vsel %vm140, %v223, %v226
  %228 = vrot.lane.b32.xlu0 %v227, 64
  %v229 = vpop.permute.xlu0 %228
  %231 = vst.msk [vmem:[#allocation2 + $0x2] sm:$0x3] %vm169, %v229
  %v232 = vrot.slane %v219, 1
  %v233 = vsel %vm129, %v232, %v232
  %v234 = vsel %vm131, %v232, %v233
  %v235 = vsel %vm134, %v220, %v234
  %v236 = vsel %vm136, %v220, %v235
  %v237 = vsel %vm138, %v220, %v236
  %v238 = vsel %vm140, %v220, %v237
  %239 = vrot.lane.b32.xlu0 %v238, 96
  %v240 = vpop.permute.xlu0 %239
  %242 = vst.msk [vmem:[#allocation2 + $0x2] sm:$0x3] %vm181, %v240
  %v243 = vld [vmem:[#allocation2] sm:$0xf]
  %v244 = vld [vmem:[%s0] sm:$0xf]
  %v245 = vld [vmem:[%s0 + $0x4] sm:$0xf]
  %v246 = vld [vmem:[%s0 + $0x8] sm:$0xf]
  %v247 = vld [vmem:[%s0 + $0xc] sm:$0xf]
  %v248 = vld [vmem:[%s3] sm:$0xf]
  %v249 = vld [vmem:[%s3 + $0x4] sm:$0xf]
  %v250 = vld [vmem:[%s3 + $0x8] sm:$0xf]
  %v251 = vld [vmem:[%s3 + $0xc] sm:$0xf]
  %v256 = vunpack.c.l.b16 %v244
  %v257 = vunpack.c.l.b16 %v245
  %v258 = vunpack.c.l.b16 %v246
  %v259 = vunpack.c.l.b16 %v247
  %v260 = vpack.c.b16 %v257, %v256
  %v261 = vpack.c.b16 %v259, %v258
  %v266 = vunpack.c.l.b16 %v248
  %v267 = vunpack.c.l.b16 %v249
  %v268 = vunpack.c.l.b16 %v250
  %v269 = vunpack.c.l.b16 %v251
  %v270 = vpack.c.b16 %v267, %v266
  %v271 = vpack.c.b16 %v269, %v268
  %v275 = vsel %vm68, %v260, 0
  %v278 = vsel %vm68, %v261, 0
  %280 = vmatprep.subr.bf16.mxu0 0
  %281 = vmatpush1.bf16.msra.mxu0 %v270
  %282 = vmatprep.subr.bf16.mxu0 0
  %283 = vmatpush1.bf16.msra.mxu0 %v271
  %284 = vmatprep.subr.bf16.mxu0 0
  %285 = vmatpush1.bf16.msra.mxu0 0
  %286 = vmatprep.subr.bf16.mxu0 0
  %287 = vmatpush1.bf16.msra.mxu0 0
  %288 = vmatprep.subr.bf16.mxu0 0
  %289 = vmatpush1.bf16.msra.mxu0 0
  %290 = vmatprep.subr.bf16.mxu0 0
  %291 = vmatpush1.bf16.msra.mxu0 0
  %292 = vmatprep.subr.bf16.mxu0 0
  %293 = vmatpush1.bf16.msra.mxu0 0
  %294 = vmatprep.subr.bf16.mxu0 0
  %295 = vmatpush1.bf16.msra.mxu0 0
  %296 = vmatprep.subr.bf16.mxu0 0
  %297 = vmatpush1.bf16.msra.mxu0 0
  %298 = vmatprep.subr.bf16.mxu0 0
  %299 = vmatpush1.bf16.msra.mxu0 0
  %300 = vmatprep.subr.bf16.mxu0 0
  %301 = vmatpush1.bf16.msra.mxu0 0
  %302 = vmatprep.subr.bf16.mxu0 0
  %303 = vmatpush1.bf16.msra.mxu0 0
  %304 = vmatprep.subr.bf16.mxu0 0
  %305 = vmatpush1.bf16.msra.mxu0 0
  %306 = vmatprep.subr.bf16.mxu0 0
  %307 = vmatpush1.bf16.msra.mxu0 0
  %308 = vmatprep.subr.bf16.mxu0 0
  %309 = vmatpush1.bf16.msra.mxu0 0
  %310 = vmatprep.subr.bf16.mxu0 0
  %311 = vmatpush1.bf16.msra.mxu0 0
  %312 = vmatprep.mubr.bf16.mxu0 0
  %313 = vmatmul.mubr.bf16.gmra.mrb[0].mxu0 %v275
  %v314 = vpop.f32.mrb[0].mxu0
  %v315 = vadd.f32 0.0, %v314
  %v316 = vpop.f32.mrb[0].mxu0
  %v317 = vpop.f32.mrb[0].mxu0
  %v318 = vadd.f32 0.0, %v317
  %v319 = vpop.f32.mrb[0].mxu0
  %320 = vmatprep.mubr.bf16.mxu0 0
  %321 = vmatmul.mubr.bf16.gmra.mrb[0].mxu0 %v278
  %v322 = vpop.f32.mrb[0].mxu0
  %v323 = vadd.f32 0.0, %v322
  %v324 = vpop.f32.mrb[0].mxu0
  %v325 = vpop.f32.mrb[0].mxu0
  %v326 = vadd.f32 0.0, %v325
  %v327 = vpop.f32.mrb[0].mxu0
  %328 = vdwg.mxu0
  %v329 = vpack.c.bf16 %v318, %v315
  %v330 = vpack.c.bf16 %v326, %v323
  %v331 = vld [vmem:[%s7] sm:$0xff]
  %v332 = vld [vmem:[%s7 + $0x8] sm:$0xff]
  %v333 = vld [vmem:[%s7 + $0x10] sm:$0xff]
  %v334 = vld [vmem:[%s7 + $0x18] sm:$0xff]
  %v339 = vunpack.c.l.b16 %v331
  %v340 = vunpack.c.h.b16 %v331
  %v341 = vunpack.c.l.b16 %v332
  %v342 = vunpack.c.h.b16 %v332
  %v343 = vunpack.c.l.b16 %v333
  %v344 = vunpack.c.h.b16 %v333
  %v345 = vunpack.c.l.b16 %v334
  %v346 = vunpack.c.h.b16 %v334
  %v347 = vpack.c.b16 %v341, %v339
  %v348 = vpack.c.b16 %v342, %v340
  %v349 = vpack.c.b16 %v345, %v343
  %v350 = vpack.c.b16 %v346, %v344
  %v356 = vsel %vm68, %v329, 0
  %v359 = vsel %vm68, %v330, 0
  %361 = vmatprep.subr.bf16.mxu0 %v348
  %362 = vmatpush1.bf16.msra.mxu0 %v347
  %363 = vmatprep.subr.bf16.mxu0 %v350
  %364 = vmatpush1.bf16.msra.mxu0 %v349
  %365 = vmatprep.subr.bf16.mxu0 0
  %366 = vmatpush1.bf16.msra.mxu0 0
  %367 = vmatprep.subr.bf16.mxu0 0
  %368 = vmatpush1.bf16.msra.mxu0 0
  %369 = vmatprep.subr.bf16.mxu0 0
  %370 = vmatpush1.bf16.msra.mxu0 0
  %371 = vmatprep.subr.bf16.mxu0 0
  %372 = vmatpush1.bf16.msra.mxu0 0
  %373 = vmatprep.subr.bf16.mxu0 0
  %374 = vmatpush1.bf16.msra.mxu0 0
  %375 = vmatprep.subr.bf16.mxu0 0
  %376 = vmatpush1.bf16.msra.mxu0 0
  %377 = vmatprep.subr.bf16.mxu0 0
  %378 = vmatpush1.bf16.msra.mxu0 0
  %379 = vmatprep.subr.bf16.mxu0 0
  %380 = vmatpush1.bf16.msra.mxu0 0
  %381 = vmatprep.subr.bf16.mxu0 0
  %382 = vmatpush1.bf16.msra.mxu0 0
  %383 = vmatprep.subr.bf16.mxu0 0
  %384 = vmatpush1.bf16.msra.mxu0 0
  %385 = vmatprep.subr.bf16.mxu0 0
  %386 = vmatpush1.bf16.msra.mxu0 0
  %387 = vmatprep.subr.bf16.mxu0 0
  %388 = vmatpush1.bf16.msra.mxu0 0
  %389 = vmatprep.subr.bf16.mxu0 0
  %390 = vmatpush1.bf16.msra.mxu0 0
  %391 = vmatprep.subr.bf16.mxu0 0
  %392 = vmatpush1.bf16.msra.mxu0 0
  %393 = vmatprep.mubr.bf16.mxu0 0
  %394 = vmatmul.mubr.bf16.gmra.mrb[0].mxu0 %v356
  %v395 = vpop.f32.mrb[0].mxu0
  %v396 = vadd.f32 0.0, %v395
  %v397 = vpop.f32.mrb[0].mxu0
  %v398 = vadd.f32 0.0, %v397
  %v399 = vpop.f32.mrb[0].mxu0
  %v400 = vadd.f32 0.0, %v399
  %v401 = vpop.f32.mrb[0].mxu0
  %v402 = vadd.f32 0.0, %v401
  %403 = vmatprep.mubr.bf16.mxu0 0
  %404 = vmatmul.mubr.bf16.gmra.mrb[0].mxu0 %v359
  %v405 = vpop.f32.mrb[0].mxu0
  %v406 = vadd.f32 0.0, %v405
  %v407 = vpop.f32.mrb[0].mxu0
  %v408 = vadd.f32 0.0, %v407
  %v409 = vpop.f32.mrb[0].mxu0
  %v410 = vadd.f32 0.0, %v409
  %v411 = vpop.f32.mrb[0].mxu0
  %v412 = vadd.f32 0.0, %v411
  %413 = vdwg.mxu0
  %v416 = vunpack.c.l.s4 1966171168
  %v417 = vunpack.c.0.s8 %v416
  %v418 = vlaneseq
  %v419 = vshrl.u32 %v418, 7
  %v420 = vsub.s32 %v417, %v419
  %v421 = vrot.slane %v243, %v420
  %v422 = vcombine.high %v421, %v421
  %v423 = vlaneseq
  %v424 = vshrl.u32 %v423, 7
  %v425 = vsub.s32 0, %v424
  %v426 = vrot.slane %v421, %v425
  %v427 = vlaneseq
  %v428 = vshrl.u32 %v427, 7
  %v429 = vsub.s32 1, %v428
  %v430 = vrot.slane %v421, %v429
  %v431 = vlaneseq
  %v432 = vshrl.u32 %v431, 7
  %v433 = vsub.s32 0, %v432
  %v434 = vrot.slane %v422, %v433
  %v435 = vlaneseq
  %v436 = vshrl.u32 %v435, 7
  %v437 = vsub.s32 1, %v436
  %v438 = vrot.slane %v422, %v437
  %v443 = vadd.f32 %v396, %v426
  %v444 = vadd.f32 %v398, %v430
  %v445 = vadd.f32 %v400, %v426
  %v446 = vadd.f32 %v402, %v430
  %v447 = vadd.f32 %v406, %v434
  %v448 = vadd.f32 %v408, %v438
  %v449 = vadd.f32 %v410, %v434
  %v450 = vadd.f32 %v412, %v438
  %v451 = vtanh.pop %v443
  %v452 = vtanh.pop %v444
  %v453 = vtanh.pop %v445
  %v454 = vtanh.pop %v446
  %v455 = vtanh.pop %v447
  %v456 = vtanh.pop %v448
  %v457 = vtanh.pop %v449
  %v458 = vtanh.pop %v450
  %v459 = vpack.c.bf16 %v453, %v451
  %v460 = vpack.c.bf16 %v454, %v452
  %v461 = vpack.c.bf16 %v457, %v455
  %v462 = vpack.c.bf16 %v458, %v456
  %v463 = vld [vmem:[%s8] sm:$0xf]
  %v464 = vld [vmem:[%s8 + $0x4] sm:$0xf]
  %v465 = vld [vmem:[%s8 + $0x8] sm:$0xf]
  %v466 = vld [vmem:[%s8 + $0xc] sm:$0xf]
  %v467 = vld [vmem:[%s8 + $0x10] sm:$0xf]
  %v468 = vld [vmem:[%s8 + $0x14] sm:$0xf]
  %v469 = vld [vmem:[%s8 + $0x18] sm:$0xf]
  %v470 = vld [vmem:[%s8 + $0x1c] sm:$0xf]
  %v471 = vld [vmem:[%s8 + $0x20] sm:$0xf]
  %v472 = vld [vmem:[%s8 + $0x24] sm:$0xf]
  %v473 = vld [vmem:[%s8 + $0x28] sm:$0xf]
  %v474 = vld [vmem:[%s8 + $0x2c] sm:$0xf]
  %v475 = vld [vmem:[%s8 + $0x30] sm:$0xf]
  %v476 = vld [vmem:[%s8 + $0x34] sm:$0xf]
  %v477 = vld [vmem:[%s8 + $0x38] sm:$0xf]
  %v478 = vld [vmem:[%s8 + $0x3c] sm:$0xf]
  %v479 = vld [vmem:[%s8 + $0x40] sm:$0xf]
  %v480 = vld [vmem:[%s8 + $0x44] sm:$0xf]
  %v481 = vld [vmem:[%s8 + $0x48] sm:$0xf]
  %v482 = vld [vmem:[%s8 + $0x4c] sm:$0xf]
  %v483 = vld [vmem:[%s8 + $0x50] sm:$0xf]
  %v484 = vld [vmem:[%s8 + $0x54] sm:$0xf]
  %v485 = vld [vmem:[%s8 + $0x58] sm:$0xf]
  %v486 = vld [vmem:[%s8 + $0x5c] sm:$0xf]
  %v487 = vld [vmem:[%s8 + $0x60] sm:$0xf]
  %v488 = vld [vmem:[%s8 + $0x64] sm:$0xf]
  %v489 = vld [vmem:[%s8 + $0x68] sm:$0xf]
  %v490 = vld [vmem:[%s8 + $0x6c] sm:$0xf]
  %v491 = vld [vmem:[%s8 + $0x70] sm:$0xf]
  %v492 = vld [vmem:[%s8 + $0x74] sm:$0xf]
  %v493 = vld [vmem:[%s8 + $0x78] sm:$0xf]
  %v494 = vld [vmem:[%s8 + $0x7c] sm:$0xf]
  %v527 = vunpack.c.l.b16 %v463
  %v528 = vunpack.c.l.b16 %v464
  %v529 = vunpack.c.l.b16 %v465
  %v530 = vunpack.c.l.b16 %v466
  %v531 = vunpack.c.l.b16 %v467
  %v532 = vunpack.c.l.b16 %v468
  %v533 = vunpack.c.l.b16 %v469
  %v534 = vunpack.c.l.b16 %v470
  %v535 = vunpack.c.l.b16 %v471
  %v536 = vunpack.c.l.b16 %v472
  %v537 = vunpack.c.l.b16 %v473
  %v538 = vunpack.c.l.b16 %v474
  %v539 = vunpack.c.l.b16 %v475
  %v540 = vunpack.c.l.b16 %v476
  %v541 = vunpack.c.l.b16 %v477
  %v542 = vunpack.c.l.b16 %v478
  %v543 = vunpack.c.l.b16 %v479
  %v544 = vunpack.c.l.b16 %v480
  %v545 = vunpack.c.l.b16 %v481
  %v546 = vunpack.c.l.b16 %v482
  %v547 = vunpack.c.l.b16 %v483
  %v548 = vunpack.c.l.b16 %v484
  %v549 = vunpack.c.l.b16 %v485
  %v550 = vunpack.c.l.b16 %v486
  %v551 = vunpack.c.l.b16 %v487
  %v552 = vunpack.c.l.b16 %v488
  %v553 = vunpack.c.l.b16 %v489
  %v554 = vunpack.c.l.b16 %v490
  %v555 = vunpack.c.l.b16 %v491
  %v556 = vunpack.c.l.b16 %v492
  %v557 = vunpack.c.l.b16 %v493
  %v558 = vunpack.c.l.b16 %v494
  %v559 = vpack.c.b16 %v528, %v527
  %v560 = vpack.c.b16 %v530, %v529
  %v561 = vpack.c.b16 %v532, %v531
  %v562 = vpack.c.b16 %v534, %v533
  %v563 = vpack.c.b16 %v536, %v535
  %v564 = vpack.c.b16 %v538, %v537
  %v565 = vpack.c.b16 %v540, %v539
  %v566 = vpack.c.b16 %v542, %v541
  %v567 = vpack.c.b16 %v544, %v543
  %v568 = vpack.c.b16 %v546, %v545
  %v569 = vpack.c.b16 %v548, %v547
  %v570 = vpack.c.b16 %v550, %v549
  %v571 = vpack.c.b16 %v552, %v551
  %v572 = vpack.c.b16 %v554, %v553
  %v573 = vpack.c.b16 %v556, %v555
  %v574 = vpack.c.b16 %v558, %v557
  %591 = vmatprep.subr.bf16.mxu0 0
  %592 = vmatpush1.bf16.msra.mxu0 %v559
  %593 = vmatprep.subr.bf16.mxu0 0
  %594 = vmatpush1.bf16.msra.mxu0 %v560
  %595 = vmatprep.subr.bf16.mxu0 0
  %596 = vmatpush1.bf16.msra.mxu0 %v561
  %597 = vmatprep.subr.bf16.mxu0 0
  %598 = vmatpush1.bf16.msra.mxu0 %v562
  %599 = vmatprep.subr.bf16.mxu0 0
  %600 = vmatpush1.bf16.msra.mxu0 %v563
  %601 = vmatprep.subr.bf16.mxu0 0
  %602 = vmatpush1.bf16.msra.mxu0 %v564
  %603 = vmatprep.subr.bf16.mxu0 0
  %604 = vmatpush1.bf16.msra.mxu0 %v565
  %605 = vmatprep.subr.bf16.mxu0 0
  %606 = vmatpush1.bf16.msra.mxu0 %v566
  %607 = vmatprep.subr.bf16.mxu0 0
  %608 = vmatpush1.bf16.msra.mxu0 %v567
  %609 = vmatprep.subr.bf16.mxu0 0
  %610 = vmatpush1.bf16.msra.mxu0 %v568
  %611 = vmatprep.subr.bf16.mxu0 0
  %612 = vmatpush1.bf16.msra.mxu0 %v569
  %613 = vmatprep.subr.bf16.mxu0 0
  %614 = vmatpush1.bf16.msra.mxu0 %v570
  %615 = vmatprep.subr.bf16.mxu0 0
  %616 = vmatpush1.bf16.msra.mxu0 %v571
  %617 = vmatprep.subr.bf16.mxu0 0
  %618 = vmatpush1.bf16.msra.mxu0 %v572
  %619 = vmatprep.subr.bf16.mxu0 0
  %620 = vmatpush1.bf16.msra.mxu0 %v573
  %621 = vmatprep.subr.bf16.mxu0 0
  %622 = vmatpush1.bf16.msra.mxu0 %v574
  %623 = vmatprep.mubr.bf16.mxu0 %v460
  %624 = vmatmul.mubr.bf16.gmra.mrb[0].mxu0 %v459
  %v625 = vpop.f32.mrb[0].mxu0
  %v626 = vadd.f32 0.0, %v625
  %v627 = vpop.f32.mrb[0].mxu0
  %v628 = vpop.f32.mrb[0].mxu0
  %v629 = vadd.f32 0.0, %v628
  %v630 = vpop.f32.mrb[0].mxu0
  %631 = vmatprep.mubr.bf16.mxu0 %v462
  %632 = vmatmul.mubr.bf16.gmra.mrb[0].mxu0 %v461
  %v633 = vpop.f32.mrb[0].mxu0
  %v634 = vadd.f32 0.0, %v633
  %v635 = vpop.f32.mrb[0].mxu0
  %v636 = vpop.f32.mrb[0].mxu0
  %v637 = vadd.f32 0.0, %v636
  %v638 = vpop.f32.mrb[0].mxu0
  %639 = vdwg.mxu0
  %vm640 = vcmask 64512
  %v641 = vsel %vm640, %v626, -inf
  %v642 = vsel %vm640, %v629, -inf
  %v643 = vmax.f32 %v641, %v642
  %v644 = vrot.slane %v643, 4
  %v645 = vmax.f32 %v643, %v644
  %v646 = vrot.slane %v645, 2
  %v647 = vmax.f32 %v645, %v646
  %v648 = vrot.slane %v647, 1
  %v649 = vmax.f32 %v647, %v648
  %v650 = vsel %vm640, %v634, -inf
  %v651 = vsel %vm640, %v637, -inf
  %v652 = vmax.f32 %v650, %v651
  %v653 = vrot.slane %v652, 4
  %v654 = vmax.f32 %v652, %v653
  %v655 = vrot.slane %v654, 2
  %v656 = vmax.f32 %v654, %v655
  %v657 = vrot.slane %v656, 1
  %v658 = vmax.f32 %v656, %v657
  %v659 = vsub.f32 %v626, %v649
  %v660 = vsub.f32 %v629, %v649
  %v661 = vsub.f32 %v634, %v658
  %v662 = vsub.f32 %v637, %v658
  %v663 = vmul.f32 %v659, 1.442695
  %v664 = vpow.pop %v663
  %v665 = vmul.f32 %v660, 1.442695
  %v666 = vpow.pop %v665
  %v667 = vmul.f32 %v661, 1.442695
  %v668 = vpow.pop %v667
  %v669 = vmul.f32 %v662, 1.442695
  %v670 = vpow.pop %v669
  %v671 = vsel %vm640, %v664, 0.0
  %v672 = vsel %vm640, %v666, 0.0
  %v673 = vadd.f32 %v671, %v672
  %v674 = vrot.slane %v673, 4
  %v675 = vadd.f32 %v673, %v674
  %v676 = vrot.slane %v675, 2
  %v677 = vadd.f32 %v675, %v676
  %v678 = vrot.slane %v677, 1
  %v679 = vadd.f32 %v677, %v678
  %v680 = vsel %vm640, %v668, 0.0
  %v681 = vsel %vm640, %v670, 0.0
  %v682 = vadd.f32 %v680, %v681
  %v683 = vrot.slane %v682, 4
  %v684 = vadd.f32 %v682, %v683
  %v685 = vrot.slane %v684, 2
  %v686 = vadd.f32 %v684, %v685
  %v687 = vrot.slane %v686, 1
  %v688 = vadd.f32 %v686, %v687
  %v689 = vrcp.pop %v679
  %v690 = vrcp.pop %v688
  %v691 = vmul.f32 %v664, %v689
  %v692 = vmul.f32 %v666, %v689
  %v693 = vmul.f32 %v668, %v690
  %v694 = vmul.f32 %v670, %v690
  %695 = vst.msk [vmem:[%s10] sm:$0xff] %vm640, %v691
  %696 = vst.msk [vmem:[%s10 + $0x8] sm:$0xff] %vm640, %v692
  %697 = vst.msk [vmem:[%s10 + $0x10] sm:$0xff] %vm640, %v693
  %698 = vst.msk [vmem:[%s10 + $0x18] sm:$0xff] %vm640, %v694
  %v699 = vld [vmem:[%s1] sm:$0xf]
  %v700 = vld [vmem:[%s1 + $0x4] sm:$0x3]
  %v701 = vld [vmem:[%s1 + $0x8] sm:$0xf]
  %v702 = vld [vmem:[%s1 + $0xc] sm:$0x3]
  %v708 = vunpack.c.l.s4 1983009808
  %v709 = vunpack.c.0.s8 %v708
  %v710 = vlaneseq
  %v711 = vshrl.u32 %v710, 7
  %v712 = vsub.s32 %v709, %v711
  %v713 = vrot.slane %v699, %v712
  %v714 = vcombine.high %v713, %v713
  %v716 = vunpack.c.l.s4 1983009808
  %v717 = vunpack.c.0.s8 %v716
  %v718 = vlaneseq
  %v719 = vshrl.u32 %v718, 7
  %v720 = vsub.s32 %v717, %v719
  %v721 = vrot.slane %v700, %v720
  %v723 = vunpack.c.l.s4 1983009808
  %v724 = vunpack.c.0.s8 %v723
  %v725 = vlaneseq
  %v726 = vshrl.u32 %v725, 7
  %v727 = vsub.s32 %v724, %v726
  %v728 = vrot.slane %v701, %v727
  %v729 = vcombine.high %v728, %v728
  %v731 = vunpack.c.l.s4 1983009808
  %v732 = vunpack.c.0.s8 %v731
  %v733 = vlaneseq
  %v734 = vshrl.u32 %v733, 7
  %v735 = vsub.s32 %v732, %v734
  %v736 = vrot.slane %v702, %v735
  %v737 = vld [vmem:[%s4] sm:$0xf]
  %v738 = vld [vmem:[%s4 + $0x4] sm:$0xf]
  %v739 = vld [vmem:[%s4 + $0x8] sm:$0xf]
  %v740 = vcombine.low %v713, %v714
  %v741 = vcombine.low %v721, %v728
  %v743 = vunpack.c.l.s4 1983009808
  %v744 = vunpack.c.0.s8 %v743
  %v745 = vlaneseq
  %v746 = vshrl.u32 %v745, 7
  %v747 = vsub.s32 %v744, %v746
  %v748 = vrot.slane %v740, %v747
  %v750 = vunpack.c.l.s4 1983009808
  %v751 = vunpack.c.0.s8 %v750
  %v752 = vlaneseq
  %v753 = vshrl.u32 %v752, 7
  %v754 = vsub.s32 %v751, %v753
  %v755 = vrot.slane %v741, %v754
  %v756 = vcombine.low %v748, %v755
  %v757 = vcombine.low %v729, %v736
  %v759 = vunpack.c.l.s4 1983009808
  %v760 = vunpack.c.0.s8 %v759
  %v761 = vlaneseq
  %v762 = vshrl.u32 %v761, 7
  %v763 = vsub.s32 %v760, %v762
  %v764 = vrot.slane %v757, %v763
  %v768 = vunpack.c.l.b16 %v737
  %v769 = vunpack.c.l.b16 %v738
  %v770 = vunpack.c.l.b16 %v739
  %v771 = vpack.c.b16 %v769, %v768
  %v772 = vpack.c.b16 %v770, %v770
  %vm774 = vcmask 195584
  %v776 = vsel %vm774, %v756, 0
  %v779 = vsel %vm774, %v764, 0
  %vm781 = vcmask 1043456
  %v783 = vsel %vm781, %v772, 0
  %785 = vmatprep.subr.bf16.mxu0 0
  %786 = vmatpush1.bf16.msra.mxu0 %v771
  %787 = vmatprep.subr.bf16.mxu0 0
  %788 = vmatpush1.bf16.msra.mxu0 %v783
  %789 = vmatprep.subr.bf16.mxu0 0
  %790 = vmatpush1.bf16.msra.mxu0 0
  %791 = vmatprep.subr.bf16.mxu0 0
  %792 = vmatpush1.bf16.msra.mxu0 0
  %793 = vmatprep.subr.bf16.mxu0 0
  %794 = vmatpush1.bf16.msra.mxu0 0
  %795 = vmatprep.subr.bf16.mxu0 0
  %796 = vmatpush1.bf16.msra.mxu0 0
  %797 = vmatprep.subr.bf16.mxu0 0
  %798 = vmatpush1.bf16.msra.mxu0 0
  %799 = vmatprep.subr.bf16.mxu0 0
  %800 = vmatpush1.bf16.msra.mxu0 0
  %801 = vmatprep.subr.bf16.mxu0 0
  %802 = vmatpush1.bf16.msra.mxu0 0
  %803 = vmatprep.subr.bf16.mxu0 0
  %804 = vmatpush1.bf16.msra.mxu0 0
  %805 = vmatprep.subr.bf16.mxu0 0
  %806 = vmatpush1.bf16.msra.mxu0 0
  %807 = vmatprep.subr.bf16.mxu0 0
  %808 = vmatpush1.bf16.msra.mxu0 0
  %809 = vmatprep.subr.bf16.mxu0 0
  %810 = vmatpush1.bf16.msra.mxu0 0
  %811 = vmatprep.subr.bf16.mxu0 0
  %812 = vmatpush1.bf16.msra.mxu0 0
  %813 = vmatprep.subr.bf16.mxu0 0
  %814 = vmatpush1.bf16.msra.mxu0 0
  %815 = vmatprep.subr.bf16.mxu0 0
  %816 = vmatpush1.bf16.msra.mxu0 0
  %817 = vmatprep.mubr.bf16.mxu0 0
  %818 = vmatmul.mubr.bf16.gmra.mrb[0].mxu0 %v776
  %v819 = vpop.f32.mrb[0].mxu0
  %v820 = vadd.f32 0.0, %v819
  %v821 = vpop.f32.mrb[0].mxu0
  %v822 = vpop.f32.mrb[0].mxu0
  %v823 = vadd.f32 0.0, %v822
  %v824 = vpop.f32.mrb[0].mxu0
  %825 = vmatprep.mubr.bf16.mxu0 0
  %826 = vmatmul.mubr.bf16.gmra.mrb[0].mxu0 %v779
  %v827 = vpop.f32.mrb[0].mxu0
  %v828 = vadd.f32 0.0, %v827
  %v829 = vpop.f32.mrb[0].mxu0
  %v830 = vpop.f32.mrb[0].mxu0
  %v831 = vpop.f32.mrb[0].mxu0
  %832 = vdwg.mxu0
  %v833 = vpack.c.bf16 %v823, %v820
  %v834 = vpack.c.bf16 %v828, %v828
  %v835 = vld [vmem:[%s7] sm:$0xff]
  %v836 = vld [vmem:[%s7 + $0x8] sm:$0xff]
  %v837 = vld [vmem:[%s7 + $0x10] sm:$0xff]
  %v838 = vld [vmem:[%s7 + $0x18] sm:$0xff]
  %v843 = vunpack.c.l.b16 %v835
  %v844 = vunpack.c.h.b16 %v835
  %v845 = vunpack.c.l.b16 %v836
  %v846 = vunpack.c.h.b16 %v836
  %v847 = vunpack.c.l.b16 %v837
  %v848 = vunpack.c.h.b16 %v837
  %v849 = vunpack.c.l.b16 %v838
  %v850 = vunpack.c.h.b16 %v838
  %v851 = vpack.c.b16 %v845, %v843
  %v852 = vpack.c.b16 %v846, %v844
  %v853 = vpack.c.b16 %v849, %v847
  %v854 = vpack.c.b16 %v850, %v848
  %v860 = vsel %vm68, %v833, 0
  %v863 = vsel %vm68, %v834, 0
  %865 = vmatprep.subr.bf16.mxu0 %v852
  %866 = vmatpush1.bf16.msra.mxu0 %v851
  %867 = vmatprep.subr.bf16.mxu0 %v854
  %868 = vmatpush1.bf16.msra.mxu0 %v853
  %869 = vmatprep.subr.bf16.mxu0 0
  %870 = vmatpush1.bf16.msra.mxu0 0
  %871 = vmatprep.subr.bf16.mxu0 0
  %872 = vmatpush1.bf16.msra.mxu0 0
  %873 = vmatprep.subr.bf16.mxu0 0
  %874 = vmatpush1.bf16.msra.mxu0 0
  %875 = vmatprep.subr.bf16.mxu0 0
  %876 = vmatpush1.bf16.msra.mxu0 0
  %877 = vmatprep.subr.bf16.mxu0 0
  %878 = vmatpush1.bf16.msra.mxu0 0
  %879 = vmatprep.subr.bf16.mxu0 0
  %880 = vmatpush1.bf16.msra.mxu0 0
  %881 = vmatprep.subr.bf16.mxu0 0
  %882 = vmatpush1.bf16.msra.mxu0 0
  %883 = vmatprep.subr.bf16.mxu0 0
  %884 = vmatpush1.bf16.msra.mxu0 0
  %885 = vmatprep.subr.bf16.mxu0 0
  %886 = vmatpush1.bf16.msra.mxu0 0
  %887 = vmatprep.subr.bf16.mxu0 0
  %888 = vmatpush1.bf16.msra.mxu0 0
  %889 = vmatprep.subr.bf16.mxu0 0
  %890 = vmatpush1.bf16.msra.mxu0 0
  %891 = vmatprep.subr.bf16.mxu0 0
  %892 = vmatpush1.bf16.msra.mxu0 0
  %893 = vmatprep.subr.bf16.mxu0 0
  %894 = vmatpush1.bf16.msra.mxu0 0
  %895 = vmatprep.subr.bf16.mxu0 0
  %896 = vmatpush1.bf16.msra.mxu0 0
  %897 = vmatprep.mubr.bf16.mxu0 0
  %898 = vmatmul.mubr.bf16.gmra.mrb[0].mxu0 %v860
  %v899 = vpop.f32.mrb[0].mxu0
  %v900 = vadd.f32 0.0, %v899
  %v901 = vpop.f32.mrb[0].mxu0
  %v902 = vadd.f32 0.0, %v901
  %v903 = vpop.f32.mrb[0].mxu0
  %v904 = vadd.f32 0.0, %v903
  %v905 = vpop.f32.mrb[0].mxu0
  %v906 = vadd.f32 0.0, %v905
  %907 = vmatprep.mubr.bf16.mxu0 0
  %908 = vmatmul.mubr.bf16.gmra.mrb[0].mxu0 %v863
  %v909 = vpop.f32.mrb[0].mxu0
  %v910 = vadd.f32 0.0, %v909
  %v911 = vpop.f32.mrb[0].mxu0
  %v912 = vadd.f32 0.0, %v911
  %v913 = vpop.f32.mrb[0].mxu0
  %v914 = vpop.f32.mrb[0].mxu0
  %915 = vdwg.mxu0
  %v922 = vcombine.low %v900, %v902
  %v923 = vcombine.high %v900, %v902
  %v924 = vcombine.low %v904, %v906
  %v925 = vcombine.high %v904, %v906
  %v926 = vcombine.low %v910, %v912
  %v927 = vcombine.high %v910, %v912
  %v934 = vcombine.low %v426, %v430
  %v935 = vcombine.high %v426, %v430
  %v936 = vcombine.low %v434, %v438
  %v937 = vcombine.high %v434, %v438
  %v942 = vadd.f32 %v922, %v934
  %v943 = vadd.f32 %v923, %v935
  %v944 = vadd.f32 %v924, %v934
  %v945 = vadd.f32 %v925, %v936
  %v946 = vadd.f32 %v926, %v937
  %v947 = vadd.f32 %v927, %v936
  %v948 = vtanh.pop %v942
  %v949 = vtanh.pop %v943
  %v950 = vtanh.pop %v944
  %v951 = vtanh.pop %v945
  %v952 = vtanh.pop %v946
  %v953 = vtanh.pop %v947
  %v960 = vcombine.low %v948, %v949
  %v961 = vcombine.high %v948, %v949
  %v962 = vcombine.low %v950, %v951
  %v963 = vcombine.high %v950, %v951
  %v964 = vcombine.low %v952, %v953
  %v965 = vcombine.high %v952, %v953
  %v972 = vpack.c.bf16 %v962, %v960
  %v973 = vpack.c.bf16 %v963, %v961
  %v974 = vpack.c.bf16 %v964, %v964
  %v975 = vpack.c.bf16 %v965, %v965
  %v976 = vld [vmem:[%s9] sm:$0xf]
  %v977 = vld [vmem:[%s9 + $0x4] sm:$0xf]
  %v978 = vld [vmem:[%s9 + $0x8] sm:$0xf]
  %v979 = vld [vmem:[%s9 + $0xc] sm:$0xf]
  %v980 = vld [vmem:[%s9 + $0x10] sm:$0xf]
  %v981 = vld [vmem:[%s9 + $0x14] sm:$0xf]
  %v982 = vld [vmem:[%s9 + $0x18] sm:$0xf]
  %v983 = vld [vmem:[%s9 + $0x1c] sm:$0xf]
  %v984 = vld [vmem:[%s9 + $0x20] sm:$0xf]
  %v985 = vld [vmem:[%s9 + $0x24] sm:$0xf]
  %v986 = vld [vmem:[%s9 + $0x28] sm:$0xf]
  %v987 = vld [vmem:[%s9 + $0x2c] sm:$0xf]
  %v988 = vld [vmem:[%s9 + $0x30] sm:$0xf]
  %v989 = vld [vmem:[%s9 + $0x34] sm:$0xf]
  %v990 = vld [vmem:[%s9 + $0x38] sm:$0xf]
  %v991 = vld [vmem:[%s9 + $0x3c] sm:$0xf]
  %v992 = vld [vmem:[%s9 + $0x40] sm:$0xf]
  %v993 = vld [vmem:[%s9 + $0x44] sm:$0xf]
  %v994 = vld [vmem:[%s9 + $0x48] sm:$0xf]
  %v995 = vld [vmem:[%s9 + $0x4c] sm:$0xf]
  %v996 = vld [vmem:[%s9 + $0x50] sm:$0xf]
  %v997 = vld [vmem:[%s9 + $0x54] sm:$0xf]
  %v998 = vld [vmem:[%s9 + $0x58] sm:$0xf]
  %v999 = vld [vmem:[%s9 + $0x5c] sm:$0xf]
  %v1000 = vld [vmem:[%s9 + $0x60] sm:$0xf]
  %v1001 = vld [vmem:[%s9 + $0x64] sm:$0xf]
  %v1002 = vld [vmem:[%s9 + $0x68] sm:$0xf]
  %v1003 = vld [vmem:[%s9 + $0x6c] sm:$0xf]
  %v1004 = vld [vmem:[%s9 + $0x70] sm:$0xf]
  %v1005 = vld [vmem:[%s9 + $0x74] sm:$0xf]
  %v1006 = vld [vmem:[%s9 + $0x78] sm:$0xf]
  %v1007 = vld [vmem:[%s9 + $0x7c] sm:$0xf]
  %v1040 = vunpack.c.l.b16 %v976
  %v1041 = vunpack.c.l.b16 %v977
  %v1042 = vunpack.c.l.b16 %v978
  %v1043 = vunpack.c.l.b16 %v979
  %v1044 = vunpack.c.l.b16 %v980
  %v1045 = vunpack.c.l.b16 %v981
  %v1046 = vunpack.c.l.b16 %v982
  %v1047 = vunpack.c.l.b16 %v983
  %v1048 = vunpack.c.l.b16 %v984
  %v1049 = vunpack.c.l.b16 %v985
  %v1050 = vunpack.c.l.b16 %v986
  %v1051 = vunpack.c.l.b16 %v987
  %v1052 = vunpack.c.l.b16 %v988
  %v1053 = vunpack.c.l.b16 %v989
  %v1054 = vunpack.c.l.b16 %v990
  %v1055 = vunpack.c.l.b16 %v991
  %v1056 = vunpack.c.l.b16 %v992
  %v1057 = vunpack.c.l.b16 %v993
  %v1058 = vunpack.c.l.b16 %v994
  %v1059 = vunpack.c.l.b16 %v995
  %v1060 = vunpack.c.l.b16 %v996
  %v1061 = vunpack.c.l.b16 %v997
  %v1062 = vunpack.c.l.b16 %v998
  %v1063 = vunpack.c.l.b16 %v999
  %v1064 = vunpack.c.l.b16 %v1000
  %v1065 = vunpack.c.l.b16 %v1001
  %v1066 = vunpack.c.l.b16 %v1002
  %v1067 = vunpack.c.l.b16 %v1003
  %v1068 = vunpack.c.l.b16 %v1004
  %v1069 = vunpack.c.l.b16 %v1005
  %v1070 = vunpack.c.l.b16 %v1006
  %v1071 = vunpack.c.l.b16 %v1007
  %v1072 = vpack.c.b16 %v1041, %v1040
  %v1073 = vpack.c.b16 %v1043, %v1042
  %v1074 = vpack.c.b16 %v1045, %v1044
  %v1075 = vpack.c.b16 %v1047, %v1046
  %v1076 = vpack.c.b16 %v1049, %v1048
  %v1077 = vpack.c.b16 %v1051, %v1050
  %v1078 = vpack.c.b16 %v1053, %v1052
  %v1079 = vpack.c.b16 %v1055, %v1054
  %v1080 = vpack.c.b16 %v1057, %v1056
  %v1081 = vpack.c.b16 %v1059, %v1058
  %v1082 = vpack.c.b16 %v1061, %v1060
  %v1083 = vpack.c.b16 %v1063, %v1062
  %v1084 = vpack.c.b16 %v1065, %v1064
  %v1085 = vpack.c.b16 %v1067, %v1066
  %v1086 = vpack.c.b16 %v1069, %v1068
  %v1087 = vpack.c.b16 %v1071, %v1070
  %1104 = vmatprep.subr.bf16.mxu0 0
  %1105 = vmatpush1.bf16.msra.mxu0 %v1072
  %1106 = vmatprep.subr.bf16.mxu0 0
  %1107 = vmatpush1.bf16.msra.mxu0 %v1073
  %1108 = vmatprep.subr.bf16.mxu0 0
  %1109 = vmatpush1.bf16.msra.mxu0 %v1074
  %1110 = vmatprep.subr.bf16.mxu0 0
  %1111 = vmatpush1.bf16.msra.mxu0 %v1075
  %1112 = vmatprep.subr.bf16.mxu0 0
  %1113 = vmatpush1.bf16.msra.mxu0 %v1076
  %1114 = vmatprep.subr.bf16.mxu0 0
  %1115 = vmatpush1.bf16.msra.mxu0 %v1077
  %1116 = vmatprep.subr.bf16.mxu0 0
  %1117 = vmatpush1.bf16.msra.mxu0 %v1078
  %1118 = vmatprep.subr.bf16.mxu0 0
  %1119 = vmatpush1.bf16.msra.mxu0 %v1079
  %1120 = vmatprep.subr.bf16.mxu0 0
  %1121 = vmatpush1.bf16.msra.mxu0 %v1080
  %1122 = vmatprep.subr.bf16.mxu0 0
  %1123 = vmatpush1.bf16.msra.mxu0 %v1081
  %1124 = vmatprep.subr.bf16.mxu0 0
  %1125 = vmatpush1.bf16.msra.mxu0 %v1082
  %1126 = vmatprep.subr.bf16.mxu0 0
  %1127 = vmatpush1.bf16.msra.mxu0 %v1083
  %1128 = vmatprep.subr.bf16.mxu0 0
  %1129 = vmatpush1.bf16.msra.mxu0 %v1084
  %1130 = vmatprep.subr.bf16.mxu0 0
  %1131 = vmatpush1.bf16.msra.mxu0 %v1085
  %1132 = vmatprep.subr.bf16.mxu0 0
  %1133 = vmatpush1.bf16.msra.mxu0 %v1086
  %1134 = vmatprep.subr.bf16.mxu0 0
  %1135 = vmatpush1.bf16.msra.mxu0 %v1087
  %1136 = vmatprep.mubr.bf16.mxu0 %v973
  %1137 = vmatmul.mubr.bf16.gmra.mrb[0].mxu0 %v972
  %v1138 = vpop.f32.mrb[0].mxu0
  %v1139 = vadd.f32 0.0, %v1138
  %v1140 = vpop.f32.mrb[0].mxu0
  %v1141 = vpop.f32.mrb[0].mxu0
  %v1142 = vadd.f32 0.0, %v1141
  %v1143 = vpop.f32.mrb[0].mxu0
  %1144 = vmatprep.mubr.bf16.mxu0 %v975
  %1145 = vmatmul.mubr.bf16.gmra.mrb[0].mxu0 %v974
  %v1146 = vpop.f32.mrb[0].mxu0
  %v1147 = vadd.f32 0.0, %v1146
  %v1148 = vpop.f32.mrb[0].mxu0
  %v1149 = vpop.f32.mrb[0].mxu0
  %v1150 = vpop.f32.mrb[0].mxu0
  %1151 = vdwg.mxu0
  %v1155 = vcombine.high %v1139, %v1139
  %v1156 = vcombine.high %v1142, %v1142
  %v1157 = vcombine.high %v1147, %v1147
  %v1161 = vcombine.low %v1139, %v1155
  %v1162 = vcombine.low %v1156, %v1147
  %v1165 = vsel %vm640, %v1161, -inf
  %vm1166 = vcmask 60416
  %v1167 = vsel %vm1166, %v1142, -inf
  %v1168 = vmax.f32 %v1165, %v1167
  %v1169 = vrot.slane %v1168, 4
  %v1170 = vmax.f32 %v1168, %v1169
  %v1171 = vrot.slane %v1170, 2
  %v1172 = vmax.f32 %v1170, %v1171
  %v1173 = vrot.slane %v1172, 1
  %v1174 = vmax.f32 %v1172, %v1173
  %v1175 = vsel %vm640, %v1162, -inf
  %v1176 = vsel %vm1166, %v1157, -inf
  %v1177 = vmax.f32 %v1175, %v1176
  %v1178 = vrot.slane %v1177, 4
  %v1179 = vmax.f32 %v1177, %v1178
  %v1180 = vrot.slane %v1179, 2
  %v1181 = vmax.f32 %v1179, %v1180
  %v1182 = vrot.slane %v1181, 1
  %v1183 = vmax.f32 %v1181, %v1182
  %v1186 = vcombine.high %v1174, %v1174
  %v1187 = vcombine.high %v1183, %v1183
  %v1190 = vsub.f32 %v1139, %v1174
  %v1191 = vsub.f32 %v1155, %v1186
  %v1192 = vsub.f32 %v1142, %v1174
  %v1193 = vsub.f32 %v1156, %v1183
  %v1194 = vsub.f32 %v1147, %v1187
  %v1195 = vsub.f32 %v1157, %v1183
  %v1196 = vmul.f32 %v1190, 1.442695
  %v1197 = vpow.pop %v1196
  %v1198 = vmul.f32 %v1191, 1.442695
  %v1199 = vpow.pop %v1198
  %v1200 = vmul.f32 %v1192, 1.442695
  %v1201 = vpow.pop %v1200
  %v1202 = vmul.f32 %v1193, 1.442695
  %v1203 = vpow.pop %v1202
  %v1204 = vmul.f32 %v1194, 1.442695
  %v1205 = vpow.pop %v1204
  %v1206 = vmul.f32 %v1195, 1.442695
  %v1207 = vpow.pop %v1206
  %v1212 = vcombine.low %v1197, %v1199
  %v1213 = vcombine.low %v1203, %v1205
  %v1216 = vsel %vm640, %v1212, 0.0
  %v1217 = vsel %vm1166, %v1201, 0.0
  %v1218 = vadd.f32 %v1216, %v1217
  %v1219 = vrot.slane %v1218, 4
  %v1220 = vadd.f32 %v1218, %v1219
  %v1221 = vrot.slane %v1220, 2
  %v1222 = vadd.f32 %v1220, %v1221
  %v1223 = vrot.slane %v1222, 1
  %v1224 = vadd.f32 %v1222, %v1223
  %v1225 = vsel %vm640, %v1213, 0.0
  %v1226 = vsel %vm1166, %v1207, 0.0
  %v1227 = vadd.f32 %v1225, %v1226
  %v1228 = vrot.slane %v1227, 4
  %v1229 = vadd.f32 %v1227, %v1228
  %v1230 = vrot.slane %v1229, 2
  %v1231 = vadd.f32 %v1229, %v1230
  %v1232 = vrot.slane %v1231, 1
  %v1233 = vadd.f32 %v1231, %v1232
  %v1234 = vrcp.pop %v1224
  %v1235 = vrcp.pop %v1233
  %v1238 = vcombine.high %v1234, %v1234
  %v1239 = vcombine.high %v1235, %v1235
  %v1242 = vmul.f32 %v1197, %v1234
  %v1243 = vmul.f32 %v1199, %v1238
  %v1244 = vmul.f32 %v1201, %v1234
  %v1245 = vmul.f32 %v1203, %v1235
  %v1246 = vmul.f32 %v1205, %v1239
  %v1247 = vmul.f32 %v1207, %v1235
  %v1252 = vcombine.low %v1242, %v1243
  %v1253 = vcombine.low %v1245, %v1246
  %1256 = vst.msk [vmem:[%s11] sm:$0xff] %vm640, %v1252
  %1257 = vst.msk [vmem:[%s11 + $0x8] sm:$0xf] %vm1166, %v1244
  %1258 = vst.msk [vmem:[%s11 + $0x10] sm:$0xff] %vm640, %v1253
  %1259 = vst.msk [vmem:[%s11 + $0x18] sm:$0xf] %vm1166, %v1247
  // Predicated region
  $region42: #{tpu_custom_call.1} parent=0 // pred_check
    _
  $region43: #{tpu_custom_call.1} parent=0 // pred_check_branch
    %1261 = sbr.rel (0) target = $region45
  $region44: #{tpu_custom_call.1} parent=0 // pred_region
    _
  $region45: #{tpu_custom_call.1} parent=0 // pred_fallthru
    _
  // Predicated region
  $region46: #{tpu_custom_call.1} parent=0 // pred_check
    _
  $region47: #{tpu_custom_call.1} parent=0 // pred_check_branch
    %1263 = sbr.rel (0) target = $region49
  $region48: #{tpu_custom_call.1} parent=0 // pred_region
    _
  $region49: #{tpu_custom_call.1} parent=0 // pred_fallthru
    _
  // Predicated region
  $region50: #{tpu_custom_call.1} parent=0 // pred_check
    _
  $region51: #{tpu_custom_call.1} parent=0 // pred_check_branch
    %1265 = sbr.rel (0) target = $region53
  $region52: #{tpu_custom_call.1} parent=0 // pred_region
    _
  $region53: #{tpu_custom_call.1} parent=0 // pred_fallthru
    _
  // Predicated region
  $region54: #{tpu_custom_call.1} parent=0 // pred_check
    _
  $region55: #{tpu_custom_call.1} parent=0 // pred_check_branch
    %1267 = sbr.rel (0) target = $region57
  $region56: #{tpu_custom_call.1} parent=0 // pred_region
    _
  $region57: #{tpu_custom_call.1} parent=0 // pred_fallthru
    _

</llo_original>
